<compile_context>
chip_gen: v7x
topology: tpu7x:2x2x1
jax: 0.10.0
libtpu: 0.0.40
codegen_flags: <defaults>
</compile_context>

<pallas_src>
import jax
import jax.numpy as jnp
from jax.experimental import pallas as pl
from jax.experimental.pallas import tpu as pltpu


def _matmul_lrelu_kernel(x_ref, w_ref, o_ref):
    """One full-K MXU matmul per grid step (f32 accumulation), LeakyReLU(0.2)
    fused on the f32 accumulator before the bf16 writeback."""
    acc = jnp.dot(x_ref[...], w_ref[...], preferred_element_type=jnp.float32)
    o_ref[...] = jnp.where(acc > 0, acc, 0.2 * acc).astype(o_ref.dtype)


def _pick_tn(n):
    # Keep >= 2 tiles along N so v7x's 2 TensorCores can split the "parallel"
    # axis; cap at 2048 so the largest bf16 weight slab (4096 x 2048 = 16 MiB)
    # double-buffers inside v7x's 64 MiB VMEM.
    tn = min(2048, max(128, n // 2))
    assert n % tn == 0 and tn % 128 == 0, (n, tn)
    return tn


# 48 MiB scoped VMEM: covers 2 x 16 MiB weight slabs + resident activations,
# with headroom on v7x (64 MiB physical) and far below v5e/v6e's 128 MiB.
_VMEM_LIMIT_BYTES = 48 * 1024 * 1024


def conv1x1_lrelu(x, w):
    """x: (M, K) bf16 activations, w: (K, N) bf16 weights (pre-transposed).
    Returns LeakyReLU_{0.2}(x @ w) in bf16, shape (M, N)."""
    M, K = x.shape
    Kw, N = w.shape
    assert K == Kw
    tn = _pick_tn(N)

    bytes_accessed = (M * K + K * N + M * N) * 2  # everything bf16
    return pl.pallas_call(
        _matmul_lrelu_kernel,
        out_shape=jax.ShapeDtypeStruct((M, N), jnp.bfloat16),
        grid_spec=pltpu.PrefetchScalarGridSpec(
            num_scalar_prefetch=0,
            grid=(N // tn,),
            in_specs=[
                # Activation is tiny (<= 104 KiB bf16): keep it resident with a
                # constant block index (no redundant re-DMA per N step).
                pl.BlockSpec((M, K), lambda j: (0, 0)),
                # Stream one (K, tn) weight slab per grid step (full K).
                pl.BlockSpec((K, tn), lambda j: (0, j)),
            ],
            out_specs=pl.BlockSpec((M, tn), lambda j: (0, j)),
        ),
        compiler_params=pltpu.CompilerParams(
            dimension_semantics=("parallel",),
            vmem_limit_bytes=_VMEM_LIMIT_BYTES,
        ),
        cost_estimate=pl.CostEstimate(
            flops=2 * M * K * N,
            transcendentals=0,
            bytes_accessed=bytes_accessed,
        ),
    )(x, w)


# Channel sizes from the PyTorch module: 512 -> 512 -> 1024 -> 2048 -> 4096 -> 4096*3
_CHANNELS = [512, 512, 1024, 2048, 4096, 4096 * 3]
_BATCH = 13  # hardcoded in Generator.__init__
_L = 1       # forced by .reshape(13, 4096, 3): N * L must equal 13


def init_params(key):
    """Deterministic synthetic weights. PyTorch Conv1d weight shape is
    (C_out, C_in, 1); we store the transposed 2-D form (C_in, C_out), cast to
    bf16 so the HBM weight stream (the runtime floor) is halved."""
    params = []
    for i in range(len(_CHANNELS) - 1):
        c_in, c_out = _CHANNELS[i], _CHANNELS[i + 1]
        key, sub = jax.random.split(key)
        w = jax.random.normal(sub, (c_in, c_out), dtype=jnp.float32)
        w = (w / jnp.sqrt(jnp.float32(c_in))).astype(jnp.bfloat16)
        params.append(w)
    return params


def generator_forward(x_ncl, params):
    """x_ncl: (13, 512, 1) float32, NCL layout like PyTorch."""
    n, c, l = x_ncl.shape
    # (N, C, L) -> (N*L, C); for L=1 this is a squeeze of the last axis.
    x = jnp.transpose(x_ncl, (0, 2, 1)).reshape(n * l, c).astype(jnp.bfloat16)
    for w in params:
        x = conv1x1_lrelu(x, w)
    # Main output is (13, 12288); the PyTorch reshape regroups the channel
    # axis into (13, 4096, 3).  Cast back to f32 to match the module's dtype.
    # Note: further fusing all 5 layers into one pallas_call (weights via
    # memory_space=pl.ANY + manual streaming) would shave launch/ramp
    # overhead (~5-20 us) but adds complexity; per-layer calls kept here.
    return x.astype(jnp.float32).reshape(_BATCH, 4096, 3)


def generator_reference(x_ncl, params):
    """Pure-JAX reference using the same reduced-precision path (bf16 inputs,
    f32 accumulation, bf16 inter-layer activations)."""
    n, c, l = x_ncl.shape
    x = jnp.transpose(x_ncl, (0, 2, 1)).reshape(n * l, c).astype(jnp.bfloat16)
    for w in params:
        y = jnp.dot(x, w, preferred_element_type=jnp.float32)
        y = jnp.where(y > 0, y, 0.2 * y)
        x = y.astype(jnp.bfloat16)
    return x.astype(jnp.float32).reshape(_BATCH, 4096, 3)


if __name__ == "__main__":
    key = jax.random.PRNGKey(0)
    key, k_in = jax.random.split(key)
    x = jax.random.normal(k_in, (_BATCH, 512, _L), dtype=jnp.float32)
    params = init_params(key)

    out = jax.block_until_ready(generator_forward(x, params))
    ref = generator_reference(x, params)

    assert out.shape == (13, 4096, 3), out.shape
    assert out.dtype == jnp.float32, out.dtype
    max_err = float(jnp.max(jnp.abs(out - ref)))
    assert jnp.allclose(out, ref, rtol=2e-2, atol=2e-2), (
        f"mismatch vs reduced-precision reference (max abs err {max_err})"
    )

    print("KERNEL_OK")
</pallas_src>

<mosaic_0001>
module attributes {stable_mosaic.version = 11 : i64} {
  func.func @_matmul_lrelu_kernel(%arg0: i32, %arg1: memref<13x512xbf16, #tpu.memory_space<vmem>>, %arg2: memref<512x256xbf16, #tpu.memory_space<vmem>>, %arg3: memref<13x256xbf16, #tpu.memory_space<vmem>>) attributes {dimension_semantics = [#tpu.dimension_semantics<parallel>], iteration_bounds = array<i64: 2>, scalar_prefetch = 0 : i64, scratch_operands = 0 : i64, tpu.core_type = #tpu.core_type<tc>, window_params = [{pipeline_mode = #tpu.pipeline_mode<synchronous>, transform_indices = @transform_0, window_bounds = array<i64: 13, 512>}, {transform_indices = @transform_1, window_bounds = array<i64: 512, 256>}, {transform_indices = @transform_2, window_bounds = array<i64: 13, 256>}]} {
    %c0 = arith.constant 0 : index
    %c0_0 = arith.constant 0 : index
    %0 = vector.load %arg1[%c0, %c0_0] : memref<13x512xbf16, #tpu.memory_space<vmem>>, vector<13x512xbf16>
    %c0_1 = arith.constant 0 : index
    %c0_2 = arith.constant 0 : index
    %1 = vector.load %arg2[%c0_1, %c0_2] : memref<512x256xbf16, #tpu.memory_space<vmem>>, vector<512x256xbf16>
    %cst = arith.constant dense<0.000000e+00> : vector<13x256xf32>
    %2 = tpu.matmul %0, %1, %cst {dimension_numbers = #tpu.dot_dimension_numbers<[1], [0], [0], [1], [0, 0, 1, 1], [], []>} : vector<13x512xbf16>, vector<512x256xbf16>, vector<13x256xf32> -> vector<13x256xf32>
    %cst_3 = arith.constant 0.000000e+00 : f32
    %3 = vector.broadcast %cst_3 : f32 to vector<13x256xf32>
    %4 = arith.cmpf ogt, %2, %3 : vector<13x256xf32>
    %cst_4 = arith.constant 2.000000e-01 : f32
    %5 = vector.broadcast %cst_4 : f32 to vector<13x256xf32>
    %6 = arith.mulf %5, %2 : vector<13x256xf32>
    %7 = arith.select %4, %2, %6 : vector<13x256xi1>, vector<13x256xf32>
    %8 = arith.truncf %7 : vector<13x256xf32> to vector<13x256xbf16>
    %c0_5 = arith.constant 0 : index
    %c0_6 = arith.constant 0 : index
    %9 = vector.load %arg3[%c0_5, %c0_6] : memref<13x256xbf16, #tpu.memory_space<vmem>>, vector<13x256xbf16>
    tpu.vector_store %arg3[%c0_5, %c0_6], %8 {strides = array<i32>} : memref<13x256xbf16, #tpu.memory_space<vmem>>, vector<13x256xbf16>,
    return
  }
  func.func @transform_0(%arg0: i32) -> (i32, i32) {
    %c0_i32 = arith.constant 0 : i32
    %c0_i32_0 = arith.constant 0 : i32
    %c0_i32_1 = arith.constant 0 : i32
    return %c0_i32, %c0_i32_0 : i32, i32
  }
  func.func @transform_1(%arg0: i32) -> (i32, i32) {
    %c0_i32 = arith.constant 0 : i32
    %c0_i32_0 = arith.constant 0 : i32
    return %c0_i32, %arg0 : i32, i32
  }
  func.func @transform_2(%arg0: i32) -> (i32, i32) {
    %c0_i32 = arith.constant 0 : i32
    %c0_i32_0 = arith.constant 0 : i32
    return %c0_i32, %arg0 : i32, i32
  }
}

</mosaic_0001>

<llo_original>
// kernel: tpu_custom_call.1
$region0: #{tpu_custom_call.1}
  #allocation0 [shape = 'u32[]', space=smem, size = 0x4, offset = 0x4, fixed_abs, tag = 'smem constant byte address 0x4 - core index']
  #allocation1 [shape = 'u32[144,128]{1,0:T(1,128)}', space=vmem, size = 0x12000, scoped, tag = 'internal scratch']
  %s0 = inlined_call_operand.hbm [shape: bf16[13,512], index: 0, kind: input, shape index: {}]
  %s1 = inlined_call_operand.hbm [shape: bf16[512,512], index: 1, kind: input, shape index: {}]
  %s2 = inlined_call_operand.hbm [shape: bf16[13,512], index: 2, kind: output, shape index: {}]
  %s3 = sld [smem:[#allocation0]]
  $region49: #{tpu_custom_call.1} parent=0
    _
  %s5 = ssub.s32 1, %s3
  %s6 = scalar_select 0, %s5, %s3
  $region1: #{tpu_custom_call.1} parent=0
    #allocation2 [shape = 'u8[16384]{0}', space=vmem, size = 0x4000, scoped, tag = 'input window, operand 0, single buffered']
    #allocation3 [shape = 's32[2]{0}', space=sflag, size = 0x8, scoped, tag = 'scoped memory for tpu_custom_call.1']
    #allocation4 [shape = 's32[2]{0}', space=sflag, size = 0x8, scoped, tag = 'scoped memory for tpu_custom_call.1']
    #allocation5 [shape = 'u8[524288]{0}', space=vmem, size = 0x80000, scoped, tag = 'input window, operand 1']
    #allocation6 [shape = 's32[2]{0}', space=sflag, size = 0x8, scoped, tag = 'scoped memory for tpu_custom_call.1']
    #allocation7 [shape = 'u8[16384]{0}', space=vmem, size = 0x4000, scoped, tag = 'output window, operand 0']
    %7 = vsyncpa [#allocation3], 0
    %8 = vsyncpa [#allocation6], 0
    %s9 = scalar_lea.sflag [#allocation6], 1
    %10 = vsyncpa %s9, 0
    %11 = vsyncpa [#allocation4], 0
    %s12 = scalar_lea.sflag [#allocation4], 1
    %13 = vsyncpa %s12, 0
    loop: start=0, step=1, limit=4
    $region2: #{tpu_custom_call.1} parent=1 // loop_pre_header
      _
    $region3: #{tpu_custom_call.1} parent=1 // loop_header
      %s15 = sphi 0, %s19
      %p16 = scmp.ge.s32.totalorder %s15, 4
      %s23 = sphi 0, %s23
      %s25 = sphi 0, %s23
      %s26 = sphi 0, %s25
      %s40 = sphi 0, %s26
      %s46 = sphi 0, %s48
      %s49 = sphi 0, %s46
      %s50 = sphi 0, %s49
      %s66 = sphi 0, %s50
      %s72 = sphi 0, %s74
      %s75 = sphi 0, %s72
      %s76 = sphi 0, %s75
      %s92 = sphi 0, %s76
    $region4: #{tpu_custom_call.1} parent=1 // loop_header_branch
      %18 = sbr.rel (%p16) target = $region8
    $region5: #{tpu_custom_call.1} parent=1 // loop_body
      %s20 = ssub.s32 %s15, 1
      %s21 = ssub.s32 %s15, 2
      %s22 = sadd.s32 %s15, 1
      %s24 = sadd.s32 %s23, 1
      %p27 = scmp.eq.s32.totalorder %s15, 1
      %p28 = scmp.ne.s32.totalorder %s23, %s25
      %p29 = scmp.eq.s32.totalorder %s15, 0
      %p30 = por %p28, %p29
      %p31 = scmp.ne.s32.totalorder %s23, %s25
      %p32 = scmp.eq.s32.totalorder %s20, 1
      %p33 = por %p31, %p32
      %p34 = scmp.ne.s32.totalorder %s25, %s26
      %p35 = scmp.eq.s32.totalorder %s20, 0
      %p36 = por %p34, %p35
      %p37 = scmp.ne.s32.totalorder %s25, %s26
      %p38 = scmp.eq.s32.totalorder %s21, 1
      %p39 = por %p37, %p38
      %p41 = scmp.ne.s32.totalorder %s26, %s40
      %p42 = scmp.eq.s32.totalorder %s21, 0
      %p43 = por %p41, %p42
      %s44 = ssub.s32 %s15, %s22
      %p45 = scmp.eq.s32.totalorder %s44, 0
      %s47 = sadd.s32 %s46, 1
      %s48 = scalar_select %p45, %s46, %s47
      %p51 = pneg %p45
      %p52 = scmp.eq.s32.totalorder %s15, 1
      %p53 = por %p51, %p52
      %p54 = scmp.ne.s32.totalorder %s46, %s49
      %p55 = scmp.eq.s32.totalorder %s15, 0
      %p56 = por %p54, %p55
      %p57 = scmp.ne.s32.totalorder %s46, %s49
      %p58 = scmp.eq.s32.totalorder %s20, 1
      %p59 = por %p57, %p58
      %p60 = scmp.ne.s32.totalorder %s49, %s50
      %p61 = scmp.eq.s32.totalorder %s20, 0
      %p62 = por %p60, %p61
      %p63 = scmp.ne.s32.totalorder %s49, %s50
      %p64 = scmp.eq.s32.totalorder %s21, 1
      %p65 = por %p63, %p64
      %p67 = scmp.ne.s32.totalorder %s50, %s66
      %p68 = scmp.eq.s32.totalorder %s21, 0
      %p69 = por %p67, %p68
      %s70 = ssub.s32 %s15, %s22
      %p71 = scmp.eq.s32.totalorder %s70, 0
      %s73 = sadd.s32 %s72, 1
      %s74 = scalar_select %p71, %s72, %s73
      %p77 = pneg %p71
      %p78 = scmp.eq.s32.totalorder %s15, 1
      %p79 = por %p77, %p78
      %p80 = scmp.ne.s32.totalorder %s72, %s75
      %p81 = scmp.eq.s32.totalorder %s15, 0
      %p82 = por %p80, %p81
      %p83 = scmp.ne.s32.totalorder %s72, %s75
      %p84 = scmp.eq.s32.totalorder %s20, 1
      %p85 = por %p83, %p84
      %p86 = scmp.ne.s32.totalorder %s75, %s76
      %p87 = scmp.eq.s32.totalorder %s20, 0
      %p88 = por %p86, %p87
      %p89 = scmp.ne.s32.totalorder %s75, %s76
      %p90 = scmp.eq.s32.totalorder %s21, 1
      %p91 = por %p89, %p90
      %p93 = scmp.ne.s32.totalorder %s76, %s92
      %p94 = scmp.eq.s32.totalorder %s21, 0
      %p95 = por %p93, %p94
      %p96 = scmp.le.s32.totalorder 1, %s15
      %p97 = scmp.lt.s32.totalorder %s15, 3
      %p98 = pnand %p96, %p97
      %p99 = pneg %p98
      // Predicated region
      $region9: #{tpu_custom_call.1} parent=5 // pred_check
        _
      $region10: #{tpu_custom_call.1} parent=5 // pred_check_branch
        %101 = sbr.rel (%p98) target = $region12
      $region11: #{tpu_custom_call.1} parent=5 // pred_region
        %s102 = ssub.s32 %s15, 1
        // Predicated region
        $region13: #{tpu_custom_call.1} parent=11 // pred_check
          %p103 = pneg %p36
        $region14: #{tpu_custom_call.1} parent=11 // pred_check_branch
          %105 = sbr.rel (%p103) target = $region16
        $region15: #{tpu_custom_call.1} parent=11 // pred_region
          %s107 = ssub.s32 512, 512
          %108 = vsyncadd [#allocation3], %s107
          %s109 = sshll.u32 [#allocation2], 4
          %s110 = int_to_ptr.vmem [resolvable:$true] %s109
          %115 = dma.hbm_to_vmem [thread:$0]  %s0, 512, %s110, [#allocation3], 256, 256, 16
        $region16: #{tpu_custom_call.1} parent=11 // pred_fallthru
          _
      $region12: #{tpu_custom_call.1} parent=5 // pred_fallthru
        _
      %p116 = scmp.lt.s32.totalorder %s15, 2
      // Predicated region
      $region17: #{tpu_custom_call.1} parent=5 // pred_check
        %p117 = pneg %p116
      $region18: #{tpu_custom_call.1} parent=5 // pred_check_branch
        %119 = sbr.rel (%p117) target = $region20
      $region19: #{tpu_custom_call.1} parent=5 // pred_region
        // Predicated region
        $region21: #{tpu_custom_call.1} parent=19 // pred_check
          %p120 = pneg %p56
        $region22: #{tpu_custom_call.1} parent=19 // pred_check_branch
          %122 = sbr.rel (%p120) target = $region24
        $region23: #{tpu_custom_call.1} parent=19 // pred_region
          %s123 = sand.u32 %s46, 1
          %s124 = scalar_lea.sflag [#allocation6], %s123
          %s125 = sand.u32 %s46, 1
          %s126 = smul.addr %s125, 512
          %s127 = scalar_lea.vmem [#allocation5], %s126
          %s128 = smul.u32 2, %s15
          %s130 = ssub.s32 8192, 8192
          %131 = vsyncadd %s124, %s130
          %s132 = smul.addr %s128, 64
          %s133 = scalar_lea.hbm %s1, %s132
          %s134 = sshll.u32 %s127, 4
          %s135 = int_to_ptr.vmem [resolvable:$true] %s134
          %140 = dma.hbm_to_vmem [thread:$0]  %s133, 8192, %s135, %s124, 256, 128, 8
        $region24: #{tpu_custom_call.1} parent=19 // pred_fallthru
          _
      $region20: #{tpu_custom_call.1} parent=5 // pred_fallthru
        _
      %p141 = scmp.le.s32.totalorder 1, %s15
      %p142 = scmp.lt.s32.totalorder %s15, 3
      %p143 = pnand %p141, %p142
      %p144 = pneg %p143
      // Predicated region
      $region25: #{tpu_custom_call.1} parent=5 // pred_check
        _
      $region26: #{tpu_custom_call.1} parent=5 // pred_check_branch
        %146 = sbr.rel (%p143) target = $region28
      $region27: #{tpu_custom_call.1} parent=5 // pred_region
        %s147 = ssub.s32 %s15, 1
        // Predicated region
        $region29: #{tpu_custom_call.1} parent=27 // pred_check
          %p148 = pneg %p36
        $region30: #{tpu_custom_call.1} parent=27 // pred_check_branch
          %150 = sbr.rel (%p148) target = $region32
        $region31: #{tpu_custom_call.1} parent=27 // pred_region
          %151 = dma.done [#allocation3], 512
        $region32: #{tpu_custom_call.1} parent=27 // pred_fallthru
          _
        %s152 = sand.u32 %s49, 1
        %s153 = scalar_lea.sflag [#allocation6], %s152
        %s154 = sand.u32 %s49, 1
        %s155 = smul.addr %s154, 512
        %s156 = scalar_lea.vmem [#allocation5], %s155
        // Predicated region
        $region33: #{tpu_custom_call.1} parent=27 // pred_check
          %p157 = pneg %p62
        $region34: #{tpu_custom_call.1} parent=27 // pred_check_branch
          %159 = sbr.rel (%p157) target = $region36
        $region35: #{tpu_custom_call.1} parent=27 // pred_region
          %160 = dma.done %s153, 8192
        $region36: #{tpu_custom_call.1} parent=27 // pred_fallthru
          _
        %p161 = pneg %p36
        %p162 = pneg %p33
        %s163 = sand.u32 %s49, 1
        %s164 = scalar_lea.sflag [#allocation6], %s163
        %s165 = sand.u32 %s49, 1
        %s166 = smul.addr %s165, 512
        %s167 = scalar_lea.vmem [#allocation5], %s166
        %p168 = pneg %p62
        %p169 = pneg %p59
        %p170 = pneg %p88
        %p171 = pneg %p85
        %s172 = sand.u32 %s75, 1
        %s173 = scalar_lea.sflag [#allocation4], %s172
        %s174 = sand.u32 %s75, 1
        %s175 = smul.addr %s174, 16
        %s176 = scalar_lea.vmem [#allocation7], %s175
        %s177 = smul.u32 2, %s20
        %s178 = smul.u32 2, %s20
        %v179 = vld [vmem:[#allocation2] sm:$0xff]
        %v180 = vld [vmem:[#allocation2 + $0x8] sm:$0xff]
        %v181 = vld [vmem:[#allocation2 + $0x10] sm:$0x77]
        %v182 = vld [vmem:[#allocation2 + $0x18] sm:$0x77]
        %v183 = vld [vmem:[%s156] sm:$0xff]
        %v184 = vld [vmem:[%s156 + $0x8] sm:$0xff]
        %v185 = vld [vmem:[%s156 + $0x10] sm:$0xff]
        %v186 = vld [vmem:[%s156 + $0x18] sm:$0xff]
        %v187 = vld [vmem:[%s156 + $0x20] sm:$0xff]
        %v188 = vld [vmem:[%s156 + $0x28] sm:$0xff]
        %v189 = vld [vmem:[%s156 + $0x30] sm:$0xff]
        %v190 = vld [vmem:[%s156 + $0x38] sm:$0xff]
        %v191 = vld [vmem:[%s156 + $0x40] sm:$0xff]
        %v192 = vld [vmem:[%s156 + $0x48] sm:$0xff]
        %v193 = vld [vmem:[%s156 + $0x50] sm:$0xff]
        %v194 = vld [vmem:[%s156 + $0x58] sm:$0xff]
        %v195 = vld [vmem:[%s156 + $0x60] sm:$0xff]
        %v196 = vld [vmem:[%s156 + $0x68] sm:$0xff]
        %v197 = vld [vmem:[%s156 + $0x70] sm:$0xff]
        %v198 = vld [vmem:[%s156 + $0x78] sm:$0xff]
        %v199 = vld [vmem:[%s156 + $0x80] sm:$0xff]
        %v200 = vld [vmem:[%s156 + $0x88] sm:$0xff]
        %v201 = vld [vmem:[%s156 + $0x90] sm:$0xff]
        %v202 = vld [vmem:[%s156 + $0x98] sm:$0xff]
        %v203 = vld [vmem:[%s156 + $0xa0] sm:$0xff]
        %v204 = vld [vmem:[%s156 + $0xa8] sm:$0xff]
        %v205 = vld [vmem:[%s156 + $0xb0] sm:$0xff]
        %v206 = vld [vmem:[%s156 + $0xb8] sm:$0xff]
        %v207 = vld [vmem:[%s156 + $0xc0] sm:$0xff]
        %v208 = vld [vmem:[%s156 + $0xc8] sm:$0xff]
        %v209 = vld [vmem:[%s156 + $0xd0] sm:$0xff]
        %v210 = vld [vmem:[%s156 + $0xd8] sm:$0xff]
        %v211 = vld [vmem:[%s156 + $0xe0] sm:$0xff]
        %v212 = vld [vmem:[%s156 + $0xe8] sm:$0xff]
        %v213 = vld [vmem:[%s156 + $0xf0] sm:$0xff]
        %v214 = vld [vmem:[%s156 + $0xf8] sm:$0xff]
        %v215 = vld [vmem:[%s156 + $0x100] sm:$0xff]
        %v216 = vld [vmem:[%s156 + $0x108] sm:$0xff]
        %v217 = vld [vmem:[%s156 + $0x110] sm:$0xff]
        %v218 = vld [vmem:[%s156 + $0x118] sm:$0xff]
        %v219 = vld [vmem:[%s156 + $0x120] sm:$0xff]
        %v220 = vld [vmem:[%s156 + $0x128] sm:$0xff]
        %v221 = vld [vmem:[%s156 + $0x130] sm:$0xff]
        %v222 = vld [vmem:[%s156 + $0x138] sm:$0xff]
        %v223 = vld [vmem:[%s156 + $0x140] sm:$0xff]
        %v224 = vld [vmem:[%s156 + $0x148] sm:$0xff]
        %v225 = vld [vmem:[%s156 + $0x150] sm:$0xff]
        %v226 = vld [vmem:[%s156 + $0x158] sm:$0xff]
        %v227 = vld [vmem:[%s156 + $0x160] sm:$0xff]
        %v228 = vld [vmem:[%s156 + $0x168] sm:$0xff]
        %v229 = vld [vmem:[%s156 + $0x170] sm:$0xff]
        %v230 = vld [vmem:[%s156 + $0x178] sm:$0xff]
        %v231 = vld [vmem:[%s156 + $0x180] sm:$0xff]
        %v232 = vld [vmem:[%s156 + $0x188] sm:$0xff]
        %v233 = vld [vmem:[%s156 + $0x190] sm:$0xff]
        %v234 = vld [vmem:[%s156 + $0x198] sm:$0xff]
        %v235 = vld [vmem:[%s156 + $0x1a0] sm:$0xff]
        %v236 = vld [vmem:[%s156 + $0x1a8] sm:$0xff]
        %v237 = vld [vmem:[%s156 + $0x1b0] sm:$0xff]
        %v238 = vld [vmem:[%s156 + $0x1b8] sm:$0xff]
        %v239 = vld [vmem:[%s156 + $0x1c0] sm:$0xff]
        %v240 = vld [vmem:[%s156 + $0x1c8] sm:$0xff]
        %v241 = vld [vmem:[%s156 + $0x1d0] sm:$0xff]
        %v242 = vld [vmem:[%s156 + $0x1d8] sm:$0xff]
        %v243 = vld [vmem:[%s156 + $0x1e0] sm:$0xff]
        %v244 = vld [vmem:[%s156 + $0x1e8] sm:$0xff]
        %v245 = vld [vmem:[%s156 + $0x1f0] sm:$0xff]
        %v246 = vld [vmem:[%s156 + $0x1f8] sm:$0xff]
        %v251 = vunpack.c.l.b16 %v179
        %v252 = vunpack.c.h.b16 %v179
        %v253 = vunpack.c.l.b16 %v180
        %v254 = vunpack.c.h.b16 %v180
        %v255 = vunpack.c.l.b16 %v181
        %v256 = vunpack.c.h.b16 %v181
        %v257 = vunpack.c.l.b16 %v182
        %v258 = vunpack.c.h.b16 %v182
        %v259 = vpack.c.b16 %v255, %v251
        %v260 = vpack.c.b16 %v256, %v252
        %v261 = vpack.c.b16 %v257, %v253
        %v262 = vpack.c.b16 %v258, %v254
        %v331 = vunpack.c.l.b16 %v183
        %v332 = vunpack.c.h.b16 %v183
        %v333 = vunpack.c.l.b16 %v184
        %v334 = vunpack.c.h.b16 %v184
        %v335 = vunpack.c.l.b16 %v185
        %v336 = vunpack.c.h.b16 %v185
        %v337 = vunpack.c.l.b16 %v186
        %v338 = vunpack.c.h.b16 %v186
        %v339 = vunpack.c.l.b16 %v187
        %v340 = vunpack.c.h.b16 %v187
        %v341 = vunpack.c.l.b16 %v188
        %v342 = vunpack.c.h.b16 %v188
        %v343 = vunpack.c.l.b16 %v189
        %v344 = vunpack.c.h.b16 %v189
        %v345 = vunpack.c.l.b16 %v190
        %v346 = vunpack.c.h.b16 %v190
        %v347 = vunpack.c.l.b16 %v191
        %v348 = vunpack.c.h.b16 %v191
        %v349 = vunpack.c.l.b16 %v192
        %v350 = vunpack.c.h.b16 %v192
        %v351 = vunpack.c.l.b16 %v193
        %v352 = vunpack.c.h.b16 %v193
        %v353 = vunpack.c.l.b16 %v194
        %v354 = vunpack.c.h.b16 %v194
        %v355 = vunpack.c.l.b16 %v195
        %v356 = vunpack.c.h.b16 %v195
        %v357 = vunpack.c.l.b16 %v196
        %v358 = vunpack.c.h.b16 %v196
        %v359 = vunpack.c.l.b16 %v197
        %v360 = vunpack.c.h.b16 %v197
        %v361 = vunpack.c.l.b16 %v198
        %v362 = vunpack.c.h.b16 %v198
        %v363 = vunpack.c.l.b16 %v199
        %v364 = vunpack.c.h.b16 %v199
        %v365 = vunpack.c.l.b16 %v200
        %v366 = vunpack.c.h.b16 %v200
        %v367 = vunpack.c.l.b16 %v201
        %v368 = vunpack.c.h.b16 %v201
        %v369 = vunpack.c.l.b16 %v202
        %v370 = vunpack.c.h.b16 %v202
        %v371 = vunpack.c.l.b16 %v203
        %v372 = vunpack.c.h.b16 %v203
        %v373 = vunpack.c.l.b16 %v204
        %v374 = vunpack.c.h.b16 %v204
        %v375 = vunpack.c.l.b16 %v205
        %v376 = vunpack.c.h.b16 %v205
        %v377 = vunpack.c.l.b16 %v206
        %v378 = vunpack.c.h.b16 %v206
        %v379 = vunpack.c.l.b16 %v207
        %v380 = vunpack.c.h.b16 %v207
        %v381 = vunpack.c.l.b16 %v208
        %v382 = vunpack.c.h.b16 %v208
        %v383 = vunpack.c.l.b16 %v209
        %v384 = vunpack.c.h.b16 %v209
        %v385 = vunpack.c.l.b16 %v210
        %v386 = vunpack.c.h.b16 %v210
        %v387 = vunpack.c.l.b16 %v211
        %v388 = vunpack.c.h.b16 %v211
        %v389 = vunpack.c.l.b16 %v212
        %v390 = vunpack.c.h.b16 %v212
        %v391 = vunpack.c.l.b16 %v213
        %v392 = vunpack.c.h.b16 %v213
        %v393 = vunpack.c.l.b16 %v214
        %v394 = vunpack.c.h.b16 %v214
        %v395 = vunpack.c.l.b16 %v215
        %v396 = vunpack.c.h.b16 %v215
        %v397 = vunpack.c.l.b16 %v216
        %v398 = vunpack.c.h.b16 %v216
        %v399 = vunpack.c.l.b16 %v217
        %v400 = vunpack.c.h.b16 %v217
        %v401 = vunpack.c.l.b16 %v218
        %v402 = vunpack.c.h.b16 %v218
        %v403 = vunpack.c.l.b16 %v219
        %v404 = vunpack.c.h.b16 %v219
        %v405 = vunpack.c.l.b16 %v220
        %v406 = vunpack.c.h.b16 %v220
        %v407 = vunpack.c.l.b16 %v221
        %v408 = vunpack.c.h.b16 %v221
        %v409 = vunpack.c.l.b16 %v222
        %v410 = vunpack.c.h.b16 %v222
        %v411 = vunpack.c.l.b16 %v223
        %v412 = vunpack.c.h.b16 %v223
        %v413 = vunpack.c.l.b16 %v224
        %v414 = vunpack.c.h.b16 %v224
        %v415 = vunpack.c.l.b16 %v225
        %v416 = vunpack.c.h.b16 %v225
        %v417 = vunpack.c.l.b16 %v226
        %v418 = vunpack.c.h.b16 %v226
        %v419 = vunpack.c.l.b16 %v227
        %v420 = vunpack.c.h.b16 %v227
        %v421 = vunpack.c.l.b16 %v228
        %v422 = vunpack.c.h.b16 %v228
        %v423 = vunpack.c.l.b16 %v229
        %v424 = vunpack.c.h.b16 %v229
        %v425 = vunpack.c.l.b16 %v230
        %v426 = vunpack.c.h.b16 %v230
        %v427 = vunpack.c.l.b16 %v231
        %v428 = vunpack.c.h.b16 %v231
        %v429 = vunpack.c.l.b16 %v232
        %v430 = vunpack.c.h.b16 %v232
        %v431 = vunpack.c.l.b16 %v233
        %v432 = vunpack.c.h.b16 %v233
        %v433 = vunpack.c.l.b16 %v234
        %v434 = vunpack.c.h.b16 %v234
        %v435 = vunpack.c.l.b16 %v235
        %v436 = vunpack.c.h.b16 %v235
        %v437 = vunpack.c.l.b16 %v236
        %v438 = vunpack.c.h.b16 %v236
        %v439 = vunpack.c.l.b16 %v237
        %v440 = vunpack.c.h.b16 %v237
        %v441 = vunpack.c.l.b16 %v238
        %v442 = vunpack.c.h.b16 %v238
        %v443 = vunpack.c.l.b16 %v239
        %v444 = vunpack.c.h.b16 %v239
        %v445 = vunpack.c.l.b16 %v240
        %v446 = vunpack.c.h.b16 %v240
        %v447 = vunpack.c.l.b16 %v241
        %v448 = vunpack.c.h.b16 %v241
        %v449 = vunpack.c.l.b16 %v242
        %v450 = vunpack.c.h.b16 %v242
        %v451 = vunpack.c.l.b16 %v243
        %v452 = vunpack.c.h.b16 %v243
        %v453 = vunpack.c.l.b16 %v244
        %v454 = vunpack.c.h.b16 %v244
        %v455 = vunpack.c.l.b16 %v245
        %v456 = vunpack.c.h.b16 %v245
        %v457 = vunpack.c.l.b16 %v246
        %v458 = vunpack.c.h.b16 %v246
        %v459 = vpack.c.b16 %v333, %v331
        %v460 = vpack.c.b16 %v334, %v332
        %v461 = vpack.c.b16 %v337, %v335
        %v462 = vpack.c.b16 %v338, %v336
        %v463 = vpack.c.b16 %v341, %v339
        %v464 = vpack.c.b16 %v342, %v340
        %v465 = vpack.c.b16 %v345, %v343
        %v466 = vpack.c.b16 %v346, %v344
        %v467 = vpack.c.b16 %v349, %v347
        %v468 = vpack.c.b16 %v350, %v348
        %v469 = vpack.c.b16 %v353, %v351
        %v470 = vpack.c.b16 %v354, %v352
        %v471 = vpack.c.b16 %v357, %v355
        %v472 = vpack.c.b16 %v358, %v356
        %v473 = vpack.c.b16 %v361, %v359
        %v474 = vpack.c.b16 %v362, %v360
        %v475 = vpack.c.b16 %v365, %v363
        %v476 = vpack.c.b16 %v366, %v364
        %v477 = vpack.c.b16 %v369, %v367
        %v478 = vpack.c.b16 %v370, %v368
        %v479 = vpack.c.b16 %v373, %v371
        %v480 = vpack.c.b16 %v374, %v372
        %v481 = vpack.c.b16 %v377, %v375
        %v482 = vpack.c.b16 %v378, %v376
        %v483 = vpack.c.b16 %v381, %v379
        %v484 = vpack.c.b16 %v382, %v380
        %v485 = vpack.c.b16 %v385, %v383
        %v486 = vpack.c.b16 %v386, %v384
        %v487 = vpack.c.b16 %v389, %v387
        %v488 = vpack.c.b16 %v390, %v388
        %v489 = vpack.c.b16 %v393, %v391
        %v490 = vpack.c.b16 %v394, %v392
        %v491 = vpack.c.b16 %v397, %v395
        %v492 = vpack.c.b16 %v398, %v396
        %v493 = vpack.c.b16 %v401, %v399
        %v494 = vpack.c.b16 %v402, %v400
        %v495 = vpack.c.b16 %v405, %v403
        %v496 = vpack.c.b16 %v406, %v404
        %v497 = vpack.c.b16 %v409, %v407
        %v498 = vpack.c.b16 %v410, %v408
        %v499 = vpack.c.b16 %v413, %v411
        %v500 = vpack.c.b16 %v414, %v412
        %v501 = vpack.c.b16 %v417, %v415
        %v502 = vpack.c.b16 %v418, %v416
        %v503 = vpack.c.b16 %v421, %v419
        %v504 = vpack.c.b16 %v422, %v420
        %v505 = vpack.c.b16 %v425, %v423
        %v506 = vpack.c.b16 %v426, %v424
        %v507 = vpack.c.b16 %v429, %v427
        %v508 = vpack.c.b16 %v430, %v428
        %v509 = vpack.c.b16 %v433, %v431
        %v510 = vpack.c.b16 %v434, %v432
        %v511 = vpack.c.b16 %v437, %v435
        %v512 = vpack.c.b16 %v438, %v436
        %v513 = vpack.c.b16 %v441, %v439
        %v514 = vpack.c.b16 %v442, %v440
        %v515 = vpack.c.b16 %v445, %v443
        %v516 = vpack.c.b16 %v446, %v444
        %v517 = vpack.c.b16 %v449, %v447
        %v518 = vpack.c.b16 %v450, %v448
        %v519 = vpack.c.b16 %v453, %v451
        %v520 = vpack.c.b16 %v454, %v452
        %v521 = vpack.c.b16 %v457, %v455
        %v522 = vpack.c.b16 %v458, %v456
        %587 = vmatprep.subr.bf16.mxu0 %v460
        %588 = vmatpush1.bf16.msra.mxu0 %v459
        %589 = vmatprep.subr.bf16.mxu0 %v462
        %590 = vmatpush1.bf16.msra.mxu0 %v461
        %591 = vmatprep.subr.bf16.mxu0 %v464
        %592 = vmatpush1.bf16.msra.mxu0 %v463
        %593 = vmatprep.subr.bf16.mxu0 %v466
        %594 = vmatpush1.bf16.msra.mxu0 %v465
        %595 = vmatprep.subr.bf16.mxu0 %v468
        %596 = vmatpush1.bf16.msra.mxu0 %v467
        %597 = vmatprep.subr.bf16.mxu0 %v470
        %598 = vmatpush1.bf16.msra.mxu0 %v469
        %599 = vmatprep.subr.bf16.mxu0 %v472
        %600 = vmatpush1.bf16.msra.mxu0 %v471
        %601 = vmatprep.subr.bf16.mxu0 %v474
        %602 = vmatpush1.bf16.msra.mxu0 %v473
        %603 = vmatprep.subr.bf16.mxu0 %v476
        %604 = vmatpush1.bf16.msra.mxu0 %v475
        %605 = vmatprep.subr.bf16.mxu0 %v478
        %606 = vmatpush1.bf16.msra.mxu0 %v477
        %607 = vmatprep.subr.bf16.mxu0 %v480
        %608 = vmatpush1.bf16.msra.mxu0 %v479
        %609 = vmatprep.subr.bf16.mxu0 %v482
        %610 = vmatpush1.bf16.msra.mxu0 %v481
        %611 = vmatprep.subr.bf16.mxu0 %v484
        %612 = vmatpush1.bf16.msra.mxu0 %v483
        %613 = vmatprep.subr.bf16.mxu0 %v486
        %614 = vmatpush1.bf16.msra.mxu0 %v485
        %615 = vmatprep.subr.bf16.mxu0 %v488
        %616 = vmatpush1.bf16.msra.mxu0 %v487
        %617 = vmatprep.subr.bf16.mxu0 %v490
        %618 = vmatpush1.bf16.msra.mxu0 %v489
        %619 = vmatprep.mubr.bf16.mxu0 %v260
        %620 = vmatmul.mubr.bf16.gmra.mrb[0].mxu0 %v259
        %v621 = vpop.f32.mrb[0].mxu0
        %v622 = vadd.f32 0.0, %v621
        %v623 = vpop.f32.mrb[0].mxu0
        %v624 = vadd.f32 0.0, %v623
        %v625 = vpop.f32.mrb[0].mxu0
        %v626 = vadd.f32 0.0, %v625
        %v627 = vpop.f32.mrb[0].mxu0
        %v628 = vadd.f32 0.0, %v627
        %629 = vdwg.mxu0
        %630 = vmatprep.subr.bf16.mxu0 %v492
        %631 = vmatpush1.bf16.msra.mxu0 %v491
        %632 = vmatprep.subr.bf16.mxu0 %v494
        %633 = vmatpush1.bf16.msra.mxu0 %v493
        %634 = vmatprep.subr.bf16.mxu0 %v496
        %635 = vmatpush1.bf16.msra.mxu0 %v495
        %636 = vmatprep.subr.bf16.mxu0 %v498
        %637 = vmatpush1.bf16.msra.mxu0 %v497
        %638 = vmatprep.subr.bf16.mxu0 %v500
        %639 = vmatpush1.bf16.msra.mxu0 %v499
        %640 = vmatprep.subr.bf16.mxu0 %v502
        %641 = vmatpush1.bf16.msra.mxu0 %v501
        %642 = vmatprep.subr.bf16.mxu0 %v504
        %643 = vmatpush1.bf16.msra.mxu0 %v503
        %644 = vmatprep.subr.bf16.mxu0 %v506
        %645 = vmatpush1.bf16.msra.mxu0 %v505
        %646 = vmatprep.subr.bf16.mxu0 %v508
        %647 = vmatpush1.bf16.msra.mxu0 %v507
        %648 = vmatprep.subr.bf16.mxu0 %v510
        %649 = vmatpush1.bf16.msra.mxu0 %v509
        %650 = vmatprep.subr.bf16.mxu0 %v512
        %651 = vmatpush1.bf16.msra.mxu0 %v511
        %652 = vmatprep.subr.bf16.mxu0 %v514
        %653 = vmatpush1.bf16.msra.mxu0 %v513
        %654 = vmatprep.subr.bf16.mxu0 %v516
        %655 = vmatpush1.bf16.msra.mxu0 %v515
        %656 = vmatprep.subr.bf16.mxu0 %v518
        %657 = vmatpush1.bf16.msra.mxu0 %v517
        %658 = vmatprep.subr.bf16.mxu0 %v520
        %659 = vmatpush1.bf16.msra.mxu0 %v519
        %660 = vmatprep.subr.bf16.mxu0 %v522
        %661 = vmatpush1.bf16.msra.mxu0 %v521
        %662 = vmatprep.mubr.bf16.mxu0 %v262
        %663 = vmatmul.mubr.bf16.gmra.mrb[0].mxu0 %v261
        %v664 = vpop.f32.mrb[0].mxu0
        %v665 = vadd.f32 %v622, %v664
        %v666 = vpop.f32.mrb[0].mxu0
        %v667 = vadd.f32 %v624, %v666
        %v668 = vpop.f32.mrb[0].mxu0
        %v669 = vadd.f32 %v626, %v668
        %v670 = vpop.f32.mrb[0].mxu0
        %v671 = vadd.f32 %v628, %v670
        %672 = vdwg.mxu0
        %vm673 = vcmp.gt.f32.partialorder %v665, 0.0
        %vm674 = vcmp.gt.f32.partialorder %v667, 0.0
        %vm675 = vcmp.gt.f32.partialorder %v669, 0.0
        %vm676 = vcmp.gt.f32.partialorder %v671, 0.0
        %v677 = vmul.f32 %v665, 0.2
        %v678 = vmul.f32 %v667, 0.2
        %v679 = vmul.f32 %v669, 0.2
        %v680 = vmul.f32 %v671, 0.2
        %v681 = vsel %vm673, %v665, %v677
        %v682 = vsel %vm674, %v667, %v678
        %v683 = vsel %vm675, %v669, %v679
        %v684 = vsel %vm676, %v671, %v680
        %v685 = vpack.c.bf16 %v683, %v681
        %v686 = vpack.c.bf16 %v684, %v682
        %v689 = vunpack.c.l.b16 %v685
        %v690 = vunpack.c.l.b16 %v686
        %v691 = vunpack.c.h.b16 %v685
        %v692 = vunpack.c.h.b16 %v686
        %v693 = vpack.c.b16 %v690, %v689
        %v694 = vpack.c.b16 %v692, %v691
        %697 = vst [vmem:[%s176] sm:$0xff] %v693
        %vm698 = vcmask 1042432
        %vm699 = vsmask.f32 2304
        %vm700 = vmand %vm698, %vm699
        %vm701 = vcmask 1046532
        %vm702 = vsmask.f32 6400
        %vm703 = vmand %vm701, %vm702
        %vm704 = vmor %vm703, %vm700
        %v705 = vld [vmem:[%s176 + $0x8] sm:$0x77]
        %v706 = vsel %vm704, %v694, %v705
        %707 = vst [vmem:[%s176 + $0x8] sm:$0x77] %v706
        %s708 = sand.u32 %s75, 1
        %s709 = scalar_lea.sflag [#allocation4], %s708
        %s710 = sand.u32 %s75, 1
        %s711 = smul.addr %s710, 16
        %s712 = scalar_lea.vmem [#allocation7], %s711
        // Predicated region
        $region37: #{tpu_custom_call.1} parent=27 // pred_check
          %p713 = pneg %p85
        $region38: #{tpu_custom_call.1} parent=27 // pred_check_branch
          %715 = sbr.rel (%p713) target = $region40
        $region39: #{tpu_custom_call.1} parent=27 // pred_region
          %s716 = smul.u32 2, %s20
          %s718 = ssub.s32 256, 256
          %719 = vsyncadd %s709, %s718
          %s720 = smul.addr %s716, 64
          %s721 = scalar_lea.hbm %s2, %s720
          %s722 = sshll.u32 %s712, 4
          %s723 = int_to_ptr.vmem [resolvable:$true] %s722
          %728 = dma.vmem_to_hbm [thread:$0]  %s723, 256, %s721, %s709, 128, 256, 8
        $region40: #{tpu_custom_call.1} parent=27 // pred_fallthru
          _
      $region28: #{tpu_custom_call.1} parent=5 // pred_fallthru
        _
      %p729 = scmp.le.s32.totalorder 2, %s15
      // Predicated region
      $region41: #{tpu_custom_call.1} parent=5 // pred_check
        %p730 = pneg %p729
      $region42: #{tpu_custom_call.1} parent=5 // pred_check_branch
        %732 = sbr.rel (%p730) target = $region44
      $region43: #{tpu_custom_call.1} parent=5 // pred_region
        %s733 = ssub.s32 %s15, 2
        // Predicated region
        $region45: #{tpu_custom_call.1} parent=43 // pred_check
          %p734 = pneg %p91
        $region46: #{tpu_custom_call.1} parent=43 // pred_check_branch
          %736 = sbr.rel (%p734) target = $region48
        $region47: #{tpu_custom_call.1} parent=43 // pred_region
          %s737 = sand.u32 %s76, 1
          %s738 = scalar_lea.sflag [#allocation4], %s737
          %s739 = sand.u32 %s76, 1
          %s740 = smul.addr %s739, 16
          %s741 = scalar_lea.vmem [#allocation7], %s740
          %742 = dma.done %s738, 256
        $region48: #{tpu_custom_call.1} parent=43 // pred_fallthru
          _
      $region44: #{tpu_custom_call.1} parent=5 // pred_fallthru
        _
    $region6: #{tpu_custom_call.1} parent=1 // loop_footer
      %s19 = sadd.s32 1, %s15
    $region7: #{tpu_custom_call.1} parent=1 // loop_footer_branch
      %14 = sbr.rel target = $region3
    $region8: #{tpu_custom_call.1} parent=1 // loop_exit
      _
    %743 = vsyncpa [#allocation3], 1
    %s744 = scalar_lea.sflag [#allocation3], 1
    %745 = vsyncpa %s744, 1
    %746 = vsyncpa [#allocation6], 1
    %s747 = scalar_lea.sflag [#allocation6], 1
    %748 = vsyncpa %s747, 1
    %749 = vsyncpa [#allocation4], 1
    %s750 = scalar_lea.sflag [#allocation4], 1
    %751 = vsyncpa %s750, 1

</llo_original>
